<compile_context>
chip_gen: v5e
topology: v5e:2x2
jax: 0.10.0
libtpu: 0.0.40
codegen_flags: <defaults>
</compile_context>

<pallas_src>
import jax
import jax.numpy as jnp
from jax import lax
from jax.experimental import pallas as pl
from jax.experimental.pallas import tpu as pltpu


def critic_kernel(x_ref, w_rep_ref, vec_ref, out_ref):
    # x_ref    : (B, L*H)  encoder_output flattened over (L, H); lane-dense.
    # w_rep_ref: (L*H, H)  L vertically-tiled copies of w_ffn.T (folds the L-sum).
    # vec_ref  : (3, H)    row 0: b_ffn, row 1: w1 (as a row), row 2: b1.
    # out_ref  : (1, B)    predictions (row form).

    # Fused [sum over L] + [frame @ w_ffn.T]: a single ((1,),(0,)) contraction
    # with K = L*H = 256 (fills the 256-deep MXU on v6e/v7x, 2 clean passes on
    # v5e's 128-deep array).  No transpose, no XLU reduce.
    h0 = jnp.maximum(
        jnp.dot(x_ref[...], w_rep_ref[...], preferred_element_type=jnp.float32)
        + vec_ref[0:1, :],
        0.0,
    )                                                                 # (B, H)

    # (1,H) x (B,H) contraction on dim 1 -> (1, B): equals (h0 @ w1)^T with a
    # lane-dense w1 operand and a lane-dense result, no relayout.
    pred = lax.dot_general(
        vec_ref[1:2, :], h0,
        dimension_numbers=(((1,), (1,)), ((), ())),
        preferred_element_type=jnp.float32,
    )                                                                 # (1, B)

    # squeeze() + b1 ; with B == H this is elementwise (PyTorch broadcast quirk).
    out_ref[...] = pred + vec_ref[2:3, :]                             # (1, B)


@jax.jit
def critic_forward(encoder_output, w_ffn, b_ffn, w1, b1):
    B, L, H = encoder_output.shape
    # NOTE: this replicates the PyTorch broadcast of `.squeeze() + b1`, which
    # only works when batch == hidden_dim.  Almost certainly a bug in the
    # original model, but we keep the semantics faithfully.
    assert B == H, "PyTorch broadcast of squeeze()+b1 requires batch == hidden_dim"

    # Operand prep (weights are static in real training, so W_rep / vecs can be
    # materialized once per weight update; here they live in the jitted wrapper).
    x2d = encoder_output.reshape(B, L * H)            # free row-major view
    w_rep = jnp.tile(w_ffn.T, (L, 1))                 # (L*H, H): folds the L-sum
    vecs = jnp.stack([b_ffn, w1.reshape(H), b1])      # (3, H): one DMA, 3 vectors

    vmem_spec = pl.BlockSpec(memory_space=pltpu.MemorySpace.VMEM)

    # TODO(synk): at these shapes the kernel is pure fixed overhead (launch +
    # DMA descriptors + MXU drain); the real win is fusing it into the upstream
    # encoder kernel or batching many critic evaluations behind one pallas_call
    # with a "parallel" leading grid axis (engages both TensorCores on v7x).
    out = pl.pallas_call(
        critic_kernel,
        out_shape=jax.ShapeDtypeStruct((1, B), jnp.float32),
        in_specs=[vmem_spec] * 3,
        out_specs=vmem_spec,
    )(x2d, w_rep, vecs)
    return out.reshape(B)  # matches PyTorch .squeeze() + b1 result shape


def reference_forward(encoder_output, w_ffn, b_ffn, w1, b1):
    frame = jnp.sum(encoder_output, axis=1)
    h0 = jax.nn.relu(frame @ w_ffn.T + b_ffn)
    return jnp.squeeze(h0 @ w1) + b1


if __name__ == "__main__":
    # Small config consistent with the module: batch == hidden_dim (required by
    # the original broadcast), short sequence.
    B = 32          # config.batch_size
    L = 8           # config.max_length
    H = 32          # config.hidden_dim (== input_embed == num_neurons)

    key = jax.random.PRNGKey(0)
    k_x, k_w, k_bw, k_w1, k_b1 = jax.random.split(key, 5)

    encoder_output = jax.random.normal(k_x, (B, L, H), dtype=jnp.float32)

    # nn.Linear(H, H) init: U(-1/sqrt(H), 1/sqrt(H)); w1/b1: torch.rand -> U[0,1)
    bound = 1.0 / jnp.sqrt(H)
    w_ffn = jax.random.uniform(k_w, (H, H), minval=-bound, maxval=bound,
                               dtype=jnp.float32)
    b_ffn = jax.random.uniform(k_bw, (H,), minval=-bound, maxval=bound,
                               dtype=jnp.float32)
    w1 = jax.random.uniform(k_w1, (H, 1), dtype=jnp.float32)
    b1 = jax.random.uniform(k_b1, (H,), dtype=jnp.float32)

    out = critic_forward(encoder_output, w_ffn, b_ffn, w1, b1)
    jax.block_until_ready(out)

    ref = reference_forward(encoder_output, w_ffn, b_ffn, w1, b1)
    assert out.shape == (B,)
    assert jnp.allclose(out, ref, atol=1e-4, rtol=1e-4)

    print("KERNEL_OK")
</pallas_src>

<mosaic_0001>
module attributes {stable_mosaic.version = 11 : i64} {
  func.func @critic_kernel(%arg0: memref<32x256xf32, #tpu.memory_space<vmem>>, %arg1: memref<256x32xf32, #tpu.memory_space<vmem>>, %arg2: memref<3x32xf32, #tpu.memory_space<vmem>>, %arg3: memref<1x32xf32, #tpu.memory_space<vmem>>) attributes {dimension_semantics = [], scalar_prefetch = 0 : i64, scratch_operands = 0 : i64, tpu.core_type = #tpu.core_type<tc>} {
    %c0 = arith.constant 0 : index
    %c0_0 = arith.constant 0 : index
    %0 = vector.load %arg0[%c0, %c0_0] : memref<32x256xf32, #tpu.memory_space<vmem>>, vector<32x256xf32>
    %c0_1 = arith.constant 0 : index
    %c0_2 = arith.constant 0 : index
    %1 = vector.load %arg1[%c0_1, %c0_2] : memref<256x32xf32, #tpu.memory_space<vmem>>, vector<256x32xf32>
    %cst = arith.constant dense<0.000000e+00> : vector<32x32xf32>
    %2 = tpu.matmul %0, %1, %cst {dimension_numbers = #tpu.dot_dimension_numbers<[1], [0], [0], [1], [0, 0, 1, 1], [], []>} : vector<32x256xf32>, vector<256x32xf32>, vector<32x32xf32> -> vector<32x32xf32>
    %c0_3 = arith.constant 0 : index
    %c0_4 = arith.constant 0 : index
    %3 = vector.load %arg2[%c0_3, %c0_4] : memref<3x32xf32, #tpu.memory_space<vmem>>, vector<1x32xf32>
    %4 = vector.broadcast %3 : vector<1x32xf32> to vector<32x32xf32>
    %5 = arith.addf %2, %4 : vector<32x32xf32>
    %cst_5 = arith.constant 0.000000e+00 : f32
    %6 = vector.broadcast %cst_5 : f32 to vector<32x32xf32>
    %7 = arith.maximumf %5, %6 : vector<32x32xf32>
    %c1 = arith.constant 1 : index
    %c0_6 = arith.constant 0 : index
    %8 = vector.load %arg2[%c1, %c0_6] : memref<3x32xf32, #tpu.memory_space<vmem>>, vector<1x32xf32>
    %cst_7 = arith.constant dense<0.000000e+00> : vector<1x32xf32>
    %9 = tpu.matmul %8, %7, %cst_7 {dimension_numbers = #tpu.dot_dimension_numbers<[1], [1], [0], [0], [0, 0, 1, 0], [], []>} : vector<1x32xf32>, vector<32x32xf32>, vector<1x32xf32> -> vector<1x32xf32>
    %c2 = arith.constant 2 : index
    %c0_8 = arith.constant 0 : index
    %10 = vector.load %arg2[%c2, %c0_8] : memref<3x32xf32, #tpu.memory_space<vmem>>, vector<1x32xf32>
    %11 = arith.addf %9, %10 : vector<1x32xf32>
    %c0_9 = arith.constant 0 : index
    %c0_10 = arith.constant 0 : index
    %12 = vector.load %arg3[%c0_9, %c0_10] : memref<1x32xf32, #tpu.memory_space<vmem>>, vector<1x32xf32>
    tpu.vector_store %arg3[%c0_9, %c0_10], %11 {strides = array<i32>} : memref<1x32xf32, #tpu.memory_space<vmem>>, vector<1x32xf32>,
    return
  }
}

</mosaic_0001>

<llo_original>
// kernel: critic_forward.1
$region0: #{critic_forward.1}
  #allocation0 [shape = 'u32[]', space=smem, size = 0x4, offset = 0x4, fixed_abs, tag = 'smem constant byte address 0x4 - core index']
  #allocation1 [shape = 'u32[72,128]{1,0:T(1,128)}', space=vmem, size = 0x9000, scoped, tag = 'internal scratch']
  %s0 = inlined_call_operand.vmem [shape: f32[32,256], index: 0, kind: input, shape index: {}]
  %s1 = inlined_call_operand.vmem [shape: f32[256,32], index: 1, kind: input, shape index: {}]
  %s2 = inlined_call_operand.vmem [shape: f32[3,32], index: 2, kind: input, shape index: {}]
  %s3 = inlined_call_operand.hbm [shape: f32[1,32], index: 3, kind: output, shape index: {}]
  %s4 = sld [smem:[#allocation0]]
  $region22: #{critic_forward.1} parent=0
    _
  %s6 = ssub.s32 1, %s4
  %s7 = scalar_select 0, %s6, %s4
  $region1: #{critic_forward.1} parent=0
    #allocation2 [shape = 'u8[512]{0}', space=vmem, size = 0x400, scoped, tag = 'output window, operand 0, single buffered']
    #allocation3 [shape = 's32[1]{0}', space=sflag, size = 0x4, scoped, tag = 'scoped memory for critic_forward.1']
    %8 = vsyncpa [#allocation3], 0
    // Predicated region
    $region2: #{critic_forward.1} parent=1 // pred_check
      _
    $region3: #{critic_forward.1} parent=1 // pred_check_branch
      %10 = sbr.rel (0) target = $region5
    $region4: #{critic_forward.1} parent=1 // pred_region
      _
    $region5: #{critic_forward.1} parent=1 // pred_fallthru
      _
    // Predicated region
    $region6: #{critic_forward.1} parent=1 // pred_check
      _
    $region7: #{critic_forward.1} parent=1 // pred_check_branch
      %12 = sbr.rel (0) target = $region9
    $region8: #{critic_forward.1} parent=1 // pred_region
      _
    $region9: #{critic_forward.1} parent=1 // pred_fallthru
      _
    // Predicated region
    $region10: #{critic_forward.1} parent=1 // pred_check
      _
    $region11: #{critic_forward.1} parent=1 // pred_check_branch
      %14 = sbr.rel (0) target = $region13
    $region12: #{critic_forward.1} parent=1 // pred_region
      _
    $region13: #{critic_forward.1} parent=1 // pred_fallthru
      _
    %v15 = vld [vmem:[%s0] sm:$0xff]
    %v16 = vld [vmem:[%s0 + $0x8] sm:$0xff]
    %v17 = vld [vmem:[%s0 + $0x10] sm:$0xff]
    %v18 = vld [vmem:[%s0 + $0x18] sm:$0xff]
    %v19 = vld [vmem:[%s0 + $0x20] sm:$0xff]
    %v20 = vld [vmem:[%s0 + $0x28] sm:$0xff]
    %v21 = vld [vmem:[%s0 + $0x30] sm:$0xff]
    %v22 = vld [vmem:[%s0 + $0x38] sm:$0xff]
    %v23 = vld [vmem:[%s1] sm:$0xff]
    %v24 = vld [vmem:[%s1 + $0x8] sm:$0xff]
    %v25 = vld [vmem:[%s1 + $0x10] sm:$0xff]
    %v26 = vld [vmem:[%s1 + $0x18] sm:$0xff]
    %v27 = vld [vmem:[%s1 + $0x20] sm:$0xff]
    %v28 = vld [vmem:[%s1 + $0x28] sm:$0xff]
    %v29 = vld [vmem:[%s1 + $0x30] sm:$0xff]
    %v30 = vld [vmem:[%s1 + $0x38] sm:$0xff]
    %v31 = vld [vmem:[%s1 + $0x40] sm:$0xff]
    %v32 = vld [vmem:[%s1 + $0x48] sm:$0xff]
    %v33 = vld [vmem:[%s1 + $0x50] sm:$0xff]
    %v34 = vld [vmem:[%s1 + $0x58] sm:$0xff]
    %v35 = vld [vmem:[%s1 + $0x60] sm:$0xff]
    %v36 = vld [vmem:[%s1 + $0x68] sm:$0xff]
    %v37 = vld [vmem:[%s1 + $0x70] sm:$0xff]
    %v38 = vld [vmem:[%s1 + $0x78] sm:$0xff]
    %v39 = vld [vmem:[%s1 + $0x80] sm:$0xff]
    %v40 = vld [vmem:[%s1 + $0x88] sm:$0xff]
    %v41 = vld [vmem:[%s1 + $0x90] sm:$0xff]
    %v42 = vld [vmem:[%s1 + $0x98] sm:$0xff]
    %v43 = vld [vmem:[%s1 + $0xa0] sm:$0xff]
    %v44 = vld [vmem:[%s1 + $0xa8] sm:$0xff]
    %v45 = vld [vmem:[%s1 + $0xb0] sm:$0xff]
    %v46 = vld [vmem:[%s1 + $0xb8] sm:$0xff]
    %v47 = vld [vmem:[%s1 + $0xc0] sm:$0xff]
    %v48 = vld [vmem:[%s1 + $0xc8] sm:$0xff]
    %v49 = vld [vmem:[%s1 + $0xd0] sm:$0xff]
    %v50 = vld [vmem:[%s1 + $0xd8] sm:$0xff]
    %v51 = vld [vmem:[%s1 + $0xe0] sm:$0xff]
    %v52 = vld [vmem:[%s1 + $0xe8] sm:$0xff]
    %v53 = vld [vmem:[%s1 + $0xf0] sm:$0xff]
    %v54 = vld [vmem:[%s1 + $0xf8] sm:$0xff]
    %v55 = vld [vmem:[%s2] sm:$0x1]
    %v56 = vperm.slane %v55, 0
    %57 = vmatpush.msra.mxu0 %v38
    %58 = vmatpush.msra.mxu0 %v37
    %59 = vmatpush.msra.mxu0 %v36
    %60 = vmatpush.msra.mxu0 %v35
    %61 = vmatpush.msra.mxu0 %v34
    %62 = vmatpush.msra.mxu0 %v33
    %63 = vmatpush.msra.mxu0 %v32
    %64 = vmatpush.msra.mxu0 %v31
    %65 = vmatpush.msra.mxu0 %v30
    %66 = vmatpush.msra.mxu0 %v29
    %67 = vmatpush.msra.mxu0 %v28
    %68 = vmatpush.msra.mxu0 %v27
    %69 = vmatpush.msra.mxu0 %v26
    %70 = vmatpush.msra.mxu0 %v25
    %71 = vmatpush.msra.mxu0 %v24
    %72 = vmatpush.msra.mxu0 %v23
    %73 = vmatmul.f32.gmra.mxu0 %v15
    %v74 = vpop.f32.mrf.mxu0
    %v75 = vadd.f32 %v56, %v74
    %76 = vmatmul.f32.gmra.mxu0 %v17
    %v77 = vpop.f32.mrf.mxu0
    %v78 = vadd.f32 %v56, %v77
    %79 = vmatmul.f32.gmra.mxu0 %v19
    %v80 = vpop.f32.mrf.mxu0
    %v81 = vadd.f32 %v56, %v80
    %82 = vmatmul.f32.gmra.mxu0 %v21
    %v83 = vpop.f32.mrf.mxu0
    %v84 = vadd.f32 %v56, %v83
    %85 = vdwg.mxu0
    %86 = vmatpush.msra.mxu0 %v54
    %87 = vmatpush.msra.mxu0 %v53
    %88 = vmatpush.msra.mxu0 %v52
    %89 = vmatpush.msra.mxu0 %v51
    %90 = vmatpush.msra.mxu0 %v50
    %91 = vmatpush.msra.mxu0 %v49
    %92 = vmatpush.msra.mxu0 %v48
    %93 = vmatpush.msra.mxu0 %v47
    %94 = vmatpush.msra.mxu0 %v46
    %95 = vmatpush.msra.mxu0 %v45
    %96 = vmatpush.msra.mxu0 %v44
    %97 = vmatpush.msra.mxu0 %v43
    %98 = vmatpush.msra.mxu0 %v42
    %99 = vmatpush.msra.mxu0 %v41
    %100 = vmatpush.msra.mxu0 %v40
    %101 = vmatpush.msra.mxu0 %v39
    %102 = vmatmul.f32.gmra.mxu0 %v16
    %v103 = vpop.f32.mrf.mxu0
    %v104 = vadd.f32 %v75, %v103
    %105 = vmatmul.f32.gmra.mxu0 %v18
    %v106 = vpop.f32.mrf.mxu0
    %v107 = vadd.f32 %v78, %v106
    %108 = vmatmul.f32.gmra.mxu0 %v20
    %v109 = vpop.f32.mrf.mxu0
    %v110 = vadd.f32 %v81, %v109
    %111 = vmatmul.f32.gmra.mxu0 %v22
    %v112 = vpop.f32.mrf.mxu0
    %v113 = vadd.f32 %v84, %v112
    %114 = vdwg.mxu0
    %v115 = vmax.f32 %v104, 0.0
    %v116 = vmax.f32 %v107, 0.0
    %v117 = vmax.f32 %v110, 0.0
    %v118 = vmax.f32 %v113, 0.0
    %v119 = vld [vmem:[%s2 + $0x1] sm:$0x1]
    %v120 = vld [vmem:[%s2 + $0x2] sm:$0x1]
    %vm121 = vcmask 261120
    %v123 = vsel %vm121, %v119, 0
    %v126 = vsel %vm121, %v115, 0
    %v129 = vsel %vm121, %v116, 0
    %v132 = vsel %vm121, %v117, 0
    %v135 = vsel %vm121, %v118, 0
    %137 = vmatpush.xpose.msra.mxu0 0.0
    %138 = vmatpush.xpose.msra.mxu0 0.0
    %139 = vmatpush.xpose.msra.mxu0 0.0
    %140 = vmatpush.xpose.msra.mxu0 0.0
    %141 = vmatpush.xpose.msra.mxu0 0.0
    %142 = vmatpush.xpose.msra.mxu0 0.0
    %143 = vmatpush.xpose.msra.mxu0 0.0
    %144 = vmatpush.xpose.msra.mxu0 0.0
    %145 = vmatpush.xpose.msra.mxu0 0.0
    %146 = vmatpush.xpose.msra.mxu0 0.0
    %147 = vmatpush.xpose.msra.mxu0 0.0
    %148 = vmatpush.xpose.msra.mxu0 0.0
    %149 = vmatpush.xpose.msra.mxu0 %v135
    %150 = vmatpush.xpose.msra.mxu0 %v132
    %151 = vmatpush.xpose.msra.mxu0 %v129
    %152 = vmatpush.xpose.msra.mxu0 %v126
    %153 = vmatmul.f32.gmra.mxu0 %v123
    %v154 = vpop.f32.mrf.mxu0
    %v155 = vadd.f32 %v120, %v154
    %156 = vdwg.mxu0
    %vm157 = vcmask 253952
    %158 = vst.msk [vmem:[#allocation2] sm:$0x1] %vm157, %v155
    // Predicated region
    $region14: #{critic_forward.1} parent=1 // pred_check
      _
    $region15: #{critic_forward.1} parent=1 // pred_check_branch
      %160 = sbr.rel (0) target = $region17
    $region16: #{critic_forward.1} parent=1 // pred_region
      %162 = vsyncadd [#allocation3], 0
      %s164 = sshll.u32 [#allocation2], 4
      %s165 = int_to_ptr.vmem [resolvable:$true] %s164
      %s166 = sshll.u32 %s3, 4
      %s167 = int_to_ptr.hbm [resolvable:$true] %s166
      %169 = dma.vmem_to_hbm [thread:$0]  %s165, 16, %s167, [#allocation3]
    $region17: #{critic_forward.1} parent=1 // pred_fallthru
      _
    // Predicated region
    $region18: #{critic_forward.1} parent=1 // pred_check
      _
    $region19: #{critic_forward.1} parent=1 // pred_check_branch
      %171 = sbr.rel (0) target = $region21
    $region20: #{critic_forward.1} parent=1 // pred_region
      %173 = dma.done [#allocation3], 16
    $region21: #{critic_forward.1} parent=1 // pred_fallthru
      _
    %174 = vsyncpa [#allocation3], 1

</llo_original>
